<compile_context>
chip_gen: v5e
topology: v5e:2x2
jax: 0.10.0
libtpu: 0.0.40
codegen_flags: <defaults>
</compile_context>

<pallas_src>
import functools

import jax
import jax.numpy as jnp
from jax.experimental import pallas as pl
from jax.experimental.pallas import tpu as pltpu


def _linear_kernel(feat_ref, w_t_ref, sup_ref, *, active):
    # support row-tile = features row-tile @ W^T (weight already transposed
    # outside the kernel), optional tanh, f32 compute.
    s = jnp.dot(feat_ref[...], w_t_ref[...], preferred_element_type=jnp.float32)
    if active:
        s = jnp.tanh(s)
    sup_ref[...] = s.astype(sup_ref.dtype)


def _aggregate_kernel(adj_ref, sup_ref, out_ref):
    # output row-tile = adj row-tile @ support (full contraction per step,
    # f32 MXU accumulation).
    out_ref[...] = jnp.dot(
        adj_ref[...], sup_ref[...], preferred_element_type=jnp.float32
    ).astype(out_ref.dtype)


def gnn_layer(features, adj, weight, *, active=False, tile_m=256,
              compute_dtype=jnp.float32):
    """Pallas implementation of GNNLayer.forward.

    features: [N, F_in]  float32
    adj:      [N, N]     float32 (dense form of the sparse adjacency)
    weight:   [F_out, F_in] float32
    returns:  [N, F_out] float32
    """
    n, f_in = features.shape
    f_out, f_in_w = weight.shape
    assert adj.shape == (n, n)
    assert f_in_w == f_in

    tile_m = min(tile_m, n)
    assert n % tile_m == 0, "N must be divisible by tile_m"

    features = features.astype(jnp.float32)
    # Pre-transpose the weight outside the kernel: the MXU gets a natively
    # laid-out [F_in, F_out] RHS, no in-kernel transpose.
    w_t = jnp.transpose(weight).astype(jnp.float32)          # [F_in, F_out]
    adj_c = adj.astype(compute_dtype)

    cparams = pltpu.CompilerParams(
        dimension_semantics=("parallel",),        # independent row tiles
        vmem_limit_bytes=32 * 1024 * 1024,
    )

    # 1) support = (tanh?)(features @ W^T)  -- hoisted out of the aggregation.
    support = pl.pallas_call(
        functools.partial(_linear_kernel, active=active),
        out_shape=jax.ShapeDtypeStruct((n, f_out), compute_dtype),
        grid=(n // tile_m,),
        in_specs=[
            pl.BlockSpec((tile_m, f_in), lambda i: (i, 0)),
            pl.BlockSpec((f_in, f_out), lambda i: (0, 0)),
        ],
        out_specs=pl.BlockSpec((tile_m, f_out), lambda i: (i, 0)),
        compiler_params=cparams,
    )(features, w_t)

    # 2) output = adj @ support  -- adj is row-tiled; support (small) rides
    #    along with a constant index_map. No cross-step state anywhere.
    #    TODO(synk): for very large N / truly sparse adj, add a K-tiled
    #    'arbitrary' reduction axis and scalar-prefetched block skipping.
    output = pl.pallas_call(
        _aggregate_kernel,
        out_shape=jax.ShapeDtypeStruct((n, f_out), jnp.float32),
        grid=(n // tile_m,),
        in_specs=[
            pl.BlockSpec((tile_m, n), lambda i: (i, 0)),
            pl.BlockSpec((n, f_out), lambda i: (0, 0)),
        ],
        out_specs=pl.BlockSpec((tile_m, f_out), lambda i: (i, 0)),
        compiler_params=cparams,
    )(adj_c, support)

    return output


def gnn_layer_ref(features, adj, weight, *, active=False):
    support = features @ weight.T
    if active:
        support = jnp.tanh(support)
    return adj @ support


if __name__ == "__main__":
    key = jax.random.PRNGKey(0)
    k_feat, k_adj, k_w = jax.random.split(key, 3)

    # Small GNN shapes: N nodes, in_features, out_features.
    N, F_IN, F_OUT = 512, 64, 32

    features = jax.random.normal(k_feat, (N, F_IN), dtype=jnp.float32)

    # Dense normalized adjacency (stand-in for the sparse matrix in torch.spmm).
    adj_raw = (jax.random.uniform(k_adj, (N, N)) < 0.1).astype(jnp.float32)
    adj = adj_raw + jnp.eye(N, dtype=jnp.float32)
    adj = adj / jnp.clip(adj.sum(axis=1, keepdims=True), 1.0)

    # Xavier-uniform init for weight [out_features, in_features].
    bound = (6.0 / (F_IN + F_OUT)) ** 0.5
    weight = jax.random.uniform(
        k_w, (F_OUT, F_IN), minval=-bound, maxval=bound, dtype=jnp.float32
    )

    # f32 path: tight tolerance against the pure-JAX reference.
    for active in (False, True):
        out = jax.block_until_ready(gnn_layer(features, adj, weight, active=active))
        ref = gnn_layer_ref(features, adj, weight, active=active)
        assert out.shape == (N, F_OUT)
        err = jnp.max(jnp.abs(out - ref))
        assert jnp.allclose(out, ref, atol=1e-4, rtol=1e-4), (
            f"f32 mismatch (active={active}): max err {err}"
        )

    # bf16 adjacency/support path (halves HBM traffic for the bandwidth-bound
    # adj matmul; f32 accumulation kept). Looser tolerance from bf16 rounding.
    out_bf16 = jax.block_until_ready(
        gnn_layer(features, adj, weight, active=True, compute_dtype=jnp.bfloat16)
    )
    ref = gnn_layer_ref(features, adj, weight, active=True)
    err = jnp.max(jnp.abs(out_bf16 - ref))
    assert jnp.allclose(out_bf16, ref, atol=5e-2, rtol=5e-2), (
        f"bf16 mismatch: max err {err}"
    )

    print("KERNEL_OK")
</pallas_src>

<mosaic_0001>
module attributes {stable_mosaic.version = 11 : i64} {
  func.func @_linear_kernel(%arg0: i32, %arg1: memref<256x64xf32, #tpu.memory_space<vmem>>, %arg2: memref<64x32xf32, #tpu.memory_space<vmem>>, %arg3: memref<256x32xf32, #tpu.memory_space<vmem>>) attributes {dimension_semantics = [#tpu.dimension_semantics<parallel>], iteration_bounds = array<i64: 2>, scalar_prefetch = 0 : i64, scratch_operands = 0 : i64, tpu.core_type = #tpu.core_type<tc>, window_params = [{transform_indices = @transform_0, window_bounds = array<i64: 256, 64>}, {pipeline_mode = #tpu.pipeline_mode<synchronous>, transform_indices = @transform_1, window_bounds = array<i64: 64, 32>}, {transform_indices = @transform_2, window_bounds = array<i64: 256, 32>}]} {
    %c0 = arith.constant 0 : index
    %c0_0 = arith.constant 0 : index
    %0 = vector.load %arg1[%c0, %c0_0] : memref<256x64xf32, #tpu.memory_space<vmem>>, vector<256x64xf32>
    %c0_1 = arith.constant 0 : index
    %c0_2 = arith.constant 0 : index
    %1 = vector.load %arg2[%c0_1, %c0_2] : memref<64x32xf32, #tpu.memory_space<vmem>>, vector<64x32xf32>
    %cst = arith.constant dense<0.000000e+00> : vector<256x32xf32>
    %2 = tpu.matmul %0, %1, %cst {dimension_numbers = #tpu.dot_dimension_numbers<[1], [0], [0], [1], [0, 0, 1, 1], [], []>} : vector<256x64xf32>, vector<64x32xf32>, vector<256x32xf32> -> vector<256x32xf32>
    %c0_3 = arith.constant 0 : index
    %c0_4 = arith.constant 0 : index
    %3 = vector.load %arg3[%c0_3, %c0_4] : memref<256x32xf32, #tpu.memory_space<vmem>>, vector<256x32xf32>
    tpu.vector_store %arg3[%c0_3, %c0_4], %2 {strides = array<i32>} : memref<256x32xf32, #tpu.memory_space<vmem>>, vector<256x32xf32>,
    return
  }
  func.func @transform_0(%arg0: i32) -> (i32, i32) {
    %c0_i32 = arith.constant 0 : i32
    %c0_i32_0 = arith.constant 0 : i32
    return %arg0, %c0_i32 : i32, i32
  }
  func.func @transform_1(%arg0: i32) -> (i32, i32) {
    %c0_i32 = arith.constant 0 : i32
    %c0_i32_0 = arith.constant 0 : i32
    %c0_i32_1 = arith.constant 0 : i32
    return %c0_i32, %c0_i32_0 : i32, i32
  }
  func.func @transform_2(%arg0: i32) -> (i32, i32) {
    %c0_i32 = arith.constant 0 : i32
    %c0_i32_0 = arith.constant 0 : i32
    return %arg0, %c0_i32 : i32, i32
  }
}

</mosaic_0001>

<llo_original>
// kernel: tpu_custom_call.1
$region0: #{tpu_custom_call.1}
  #allocation0 [shape = 'u32[]', space=smem, size = 0x4, offset = 0x4, fixed_abs, tag = 'smem constant byte address 0x4 - core index']
  #allocation1 [shape = 'u32[72,128]{1,0:T(1,128)}', space=vmem, size = 0x9000, scoped, tag = 'internal scratch']
  %s0 = inlined_call_operand.vmem [shape: f32[512,64], index: 0, kind: input, shape index: {}]
  %s1 = inlined_call_operand.vmem [shape: f32[64,32], index: 1, kind: input, shape index: {}]
  %s2 = inlined_call_operand.vmem [shape: f32[512,32], index: 2, kind: output, shape index: {}]
  %s3 = sld [smem:[#allocation0]]
  $region41: #{tpu_custom_call.1} parent=0
    _
  %s5 = ssub.s32 1, %s3
  %s6 = scalar_select 0, %s5, %s3
  loop: start=0, step=1, limit=4
  $region2: #{tpu_custom_call.1} parent=0 // loop_pre_header
    _
  $region3: #{tpu_custom_call.1} parent=0 // loop_header
    %s8 = sphi 0, %s12
    %p9 = scmp.ge.s32.totalorder %s8, 4
    %s18 = sphi 0, %s20
    %s21 = sphi 0, %s18
    %s22 = sphi 0, %s21
    %s38 = sphi 0, %s22
    %s42 = sphi 0, %s42
    %s44 = sphi 0, %s42
    %s45 = sphi 0, %s44
    %s59 = sphi 0, %s45
    %s65 = sphi 0, %s67
    %s68 = sphi 0, %s65
    %s69 = sphi 0, %s68
    %s85 = sphi 0, %s69
  $region4: #{tpu_custom_call.1} parent=0 // loop_header_branch
    %11 = sbr.rel (%p9) target = $region8
  $region5: #{tpu_custom_call.1} parent=0 // loop_body
    %s13 = ssub.s32 %s8, 1
    %s14 = ssub.s32 %s8, 2
    %s15 = sadd.s32 %s8, 1
    %s16 = ssub.s32 %s8, %s15
    %p17 = scmp.eq.s32.totalorder %s16, 0
    %s19 = sadd.s32 %s18, 1
    %s20 = scalar_select %p17, %s18, %s19
    %p23 = pneg %p17
    %p24 = scmp.eq.s32.totalorder %s8, 1
    %p25 = por %p23, %p24
    %p26 = scmp.ne.s32.totalorder %s18, %s21
    %p27 = scmp.eq.s32.totalorder %s8, 0
    %p28 = por %p26, %p27
    %p29 = scmp.ne.s32.totalorder %s18, %s21
    %p30 = scmp.eq.s32.totalorder %s13, 1
    %p31 = por %p29, %p30
    %p32 = scmp.ne.s32.totalorder %s21, %s22
    %p33 = scmp.eq.s32.totalorder %s13, 0
    %p34 = por %p32, %p33
    %p35 = scmp.ne.s32.totalorder %s21, %s22
    %p36 = scmp.eq.s32.totalorder %s14, 1
    %p37 = por %p35, %p36
    %p39 = scmp.ne.s32.totalorder %s22, %s38
    %p40 = scmp.eq.s32.totalorder %s14, 0
    %p41 = por %p39, %p40
    %s43 = sadd.s32 %s42, 1
    %p46 = scmp.eq.s32.totalorder %s8, 1
    %p47 = scmp.ne.s32.totalorder %s42, %s44
    %p48 = scmp.eq.s32.totalorder %s8, 0
    %p49 = por %p47, %p48
    %p50 = scmp.ne.s32.totalorder %s42, %s44
    %p51 = scmp.eq.s32.totalorder %s13, 1
    %p52 = por %p50, %p51
    %p53 = scmp.ne.s32.totalorder %s44, %s45
    %p54 = scmp.eq.s32.totalorder %s13, 0
    %p55 = por %p53, %p54
    %p56 = scmp.ne.s32.totalorder %s44, %s45
    %p57 = scmp.eq.s32.totalorder %s14, 1
    %p58 = por %p56, %p57
    %p60 = scmp.ne.s32.totalorder %s45, %s59
    %p61 = scmp.eq.s32.totalorder %s14, 0
    %p62 = por %p60, %p61
    %s63 = ssub.s32 %s8, %s15
    %p64 = scmp.eq.s32.totalorder %s63, 0
    %s66 = sadd.s32 %s65, 1
    %s67 = scalar_select %p64, %s65, %s66
    %p70 = pneg %p64
    %p71 = scmp.eq.s32.totalorder %s8, 1
    %p72 = por %p70, %p71
    %p73 = scmp.ne.s32.totalorder %s65, %s68
    %p74 = scmp.eq.s32.totalorder %s8, 0
    %p75 = por %p73, %p74
    %p76 = scmp.ne.s32.totalorder %s65, %s68
    %p77 = scmp.eq.s32.totalorder %s13, 1
    %p78 = por %p76, %p77
    %p79 = scmp.ne.s32.totalorder %s68, %s69
    %p80 = scmp.eq.s32.totalorder %s13, 0
    %p81 = por %p79, %p80
    %p82 = scmp.ne.s32.totalorder %s68, %s69
    %p83 = scmp.eq.s32.totalorder %s14, 1
    %p84 = por %p82, %p83
    %p86 = scmp.ne.s32.totalorder %s69, %s85
    %p87 = scmp.eq.s32.totalorder %s14, 0
    %p88 = por %p86, %p87
    %p89 = scmp.le.s32.totalorder 1, %s8
    %p90 = scmp.lt.s32.totalorder %s8, 3
    %p91 = pnand %p89, %p90
    %p92 = pneg %p91
    // Predicated region
    $region9: #{tpu_custom_call.1} parent=5 // pred_check
      _
    $region10: #{tpu_custom_call.1} parent=5 // pred_check_branch
      %94 = sbr.rel (%p91) target = $region12
    $region11: #{tpu_custom_call.1} parent=5 // pred_region
      %s95 = ssub.s32 %s8, 1
      // Predicated region
      $region13: #{tpu_custom_call.1} parent=11 // pred_check
        %p96 = pneg %p55
      $region14: #{tpu_custom_call.1} parent=11 // pred_check_branch
        %98 = sbr.rel (%p96) target = $region16
      $region15: #{tpu_custom_call.1} parent=11 // pred_region
        _
      $region16: #{tpu_custom_call.1} parent=11 // pred_fallthru
        _
    $region12: #{tpu_custom_call.1} parent=5 // pred_fallthru
      _
    %p99 = scmp.lt.s32.totalorder %s8, 2
    // Predicated region
    $region17: #{tpu_custom_call.1} parent=5 // pred_check
      %p100 = pneg %p99
    $region18: #{tpu_custom_call.1} parent=5 // pred_check_branch
      %102 = sbr.rel (%p100) target = $region20
    $region19: #{tpu_custom_call.1} parent=5 // pred_region
      // Predicated region
      $region21: #{tpu_custom_call.1} parent=19 // pred_check
        %p103 = pneg %p28
      $region22: #{tpu_custom_call.1} parent=19 // pred_check_branch
        %105 = sbr.rel (%p103) target = $region24
      $region23: #{tpu_custom_call.1} parent=19 // pred_region
        %s106 = smul.u32 32, %s8
        %p107 = scmp.lt.s32.totalorder %s106, 63
        %s108 = scalar_select %p107, %s106, 63
        %s109 = smul.addr %s108, 8
        %s110 = scalar_lea.vmem %s0, %s109
        %s111 = smul.u32 32, %s8
      $region24: #{tpu_custom_call.1} parent=19 // pred_fallthru
        _
    $region20: #{tpu_custom_call.1} parent=5 // pred_fallthru
      _
    %p112 = scmp.le.s32.totalorder 1, %s8
    %p113 = scmp.lt.s32.totalorder %s8, 3
    %p114 = pnand %p112, %p113
    %p115 = pneg %p114
    // Predicated region
    $region25: #{tpu_custom_call.1} parent=5 // pred_check
      _
    $region26: #{tpu_custom_call.1} parent=5 // pred_check_branch
      %117 = sbr.rel (%p114) target = $region28
    $region27: #{tpu_custom_call.1} parent=5 // pred_region
      %s118 = ssub.s32 %s8, 1
      %s119 = smul.u32 32, %s13
      %p120 = scmp.lt.s32.totalorder %s119, 63
      %s121 = scalar_select %p120, %s119, 63
      %s122 = smul.addr %s121, 8
      %s123 = scalar_lea.vmem %s0, %s122
      %p124 = pneg %p34
      %p125 = pneg %p31
      %p126 = pneg %p55
      %p127 = pneg %p52
      %p128 = pneg %p81
      %p129 = pneg %p78
      %s130 = smul.u32 32, %s13
      %p131 = scmp.lt.s32.totalorder %s130, 63
      %s132 = scalar_select %p131, %s130, 63
      %s133 = smul.addr %s132, 8
      %s134 = scalar_lea.vmem %s2, %s133
      %s135 = smul.u32 32, %s13
      %p136 = scmp.lt.s32.totalorder %s135, 63
      %s137 = scalar_select %p136, %s135, 63
      %s138 = smul.addr %s137, 8
      %s139 = scalar_lea.vmem %s0, %s138
      %s140 = smul.u32 32, %s13
      %s141 = smul.u32 32, %s13
      %p142 = scmp.lt.s32.totalorder %s141, 63
      %s143 = scalar_select %p142, %s141, 63
      %s144 = smul.addr %s143, 8
      %s145 = scalar_lea.vmem %s2, %s144
      %s146 = smul.u32 32, %s13
      %v147 = vld [vmem:[%s139] sm:$0xff]
      %v148 = vld [vmem:[%s139 + $0x8] sm:$0xff]
      %v149 = vld [vmem:[%s139 + $0x10] sm:$0xff]
      %v150 = vld [vmem:[%s139 + $0x18] sm:$0xff]
      %v151 = vld [vmem:[%s139 + $0x20] sm:$0xff]
      %v152 = vld [vmem:[%s139 + $0x28] sm:$0xff]
      %v153 = vld [vmem:[%s139 + $0x30] sm:$0xff]
      %v154 = vld [vmem:[%s139 + $0x38] sm:$0xff]
      %v155 = vld [vmem:[%s139 + $0x40] sm:$0xff]
      %v156 = vld [vmem:[%s139 + $0x48] sm:$0xff]
      %v157 = vld [vmem:[%s139 + $0x50] sm:$0xff]
      %v158 = vld [vmem:[%s139 + $0x58] sm:$0xff]
      %v159 = vld [vmem:[%s139 + $0x60] sm:$0xff]
      %v160 = vld [vmem:[%s139 + $0x68] sm:$0xff]
      %v161 = vld [vmem:[%s139 + $0x70] sm:$0xff]
      %v162 = vld [vmem:[%s139 + $0x78] sm:$0xff]
      %v163 = vld [vmem:[%s139 + $0x80] sm:$0xff]
      %v164 = vld [vmem:[%s139 + $0x88] sm:$0xff]
      %v165 = vld [vmem:[%s139 + $0x90] sm:$0xff]
      %v166 = vld [vmem:[%s139 + $0x98] sm:$0xff]
      %v167 = vld [vmem:[%s139 + $0xa0] sm:$0xff]
      %v168 = vld [vmem:[%s139 + $0xa8] sm:$0xff]
      %v169 = vld [vmem:[%s139 + $0xb0] sm:$0xff]
      %v170 = vld [vmem:[%s139 + $0xb8] sm:$0xff]
      %v171 = vld [vmem:[%s139 + $0xc0] sm:$0xff]
      %v172 = vld [vmem:[%s139 + $0xc8] sm:$0xff]
      %v173 = vld [vmem:[%s139 + $0xd0] sm:$0xff]
      %v174 = vld [vmem:[%s139 + $0xd8] sm:$0xff]
      %v175 = vld [vmem:[%s139 + $0xe0] sm:$0xff]
      %v176 = vld [vmem:[%s139 + $0xe8] sm:$0xff]
      %v177 = vld [vmem:[%s139 + $0xf0] sm:$0xff]
      %v178 = vld [vmem:[%s139 + $0xf8] sm:$0xff]
      %v179 = vld [vmem:[%s1] sm:$0xff]
      %v180 = vld [vmem:[%s1 + $0x8] sm:$0xff]
      %v181 = vld [vmem:[%s1 + $0x10] sm:$0xff]
      %v182 = vld [vmem:[%s1 + $0x18] sm:$0xff]
      %v183 = vld [vmem:[%s1 + $0x20] sm:$0xff]
      %v184 = vld [vmem:[%s1 + $0x28] sm:$0xff]
      %v185 = vld [vmem:[%s1 + $0x30] sm:$0xff]
      %v186 = vld [vmem:[%s1 + $0x38] sm:$0xff]
      %vm187 = vcmask 523264
      %v189 = vsel %vm187, %v147, 0
      %v192 = vsel %vm187, %v148, 0
      %v195 = vsel %vm187, %v149, 0
      %v198 = vsel %vm187, %v150, 0
      %v201 = vsel %vm187, %v151, 0
      %v204 = vsel %vm187, %v152, 0
      %v207 = vsel %vm187, %v153, 0
      %v210 = vsel %vm187, %v154, 0
      %v213 = vsel %vm187, %v155, 0
      %v216 = vsel %vm187, %v156, 0
      %v219 = vsel %vm187, %v157, 0
      %v222 = vsel %vm187, %v158, 0
      %v225 = vsel %vm187, %v159, 0
      %v228 = vsel %vm187, %v160, 0
      %v231 = vsel %vm187, %v161, 0
      %v234 = vsel %vm187, %v162, 0
      %v237 = vsel %vm187, %v163, 0
      %v240 = vsel %vm187, %v164, 0
      %v243 = vsel %vm187, %v165, 0
      %v246 = vsel %vm187, %v166, 0
      %v249 = vsel %vm187, %v167, 0
      %v252 = vsel %vm187, %v168, 0
      %v255 = vsel %vm187, %v169, 0
      %v258 = vsel %vm187, %v170, 0
      %v261 = vsel %vm187, %v171, 0
      %v264 = vsel %vm187, %v172, 0
      %v267 = vsel %vm187, %v173, 0
      %v270 = vsel %vm187, %v174, 0
      %v273 = vsel %vm187, %v175, 0
      %v276 = vsel %vm187, %v176, 0
      %v279 = vsel %vm187, %v177, 0
      %v282 = vsel %vm187, %v178, 0
      %284 = vmatpush.msra.mxu0 0.0
      %285 = vmatpush.msra.mxu0 0.0
      %286 = vmatpush.msra.mxu0 0.0
      %287 = vmatpush.msra.mxu0 0.0
      %288 = vmatpush.msra.mxu0 0.0
      %289 = vmatpush.msra.mxu0 0.0
      %290 = vmatpush.msra.mxu0 0.0
      %291 = vmatpush.msra.mxu0 0.0
      %292 = vmatpush.msra.mxu0 %v186
      %293 = vmatpush.msra.mxu0 %v185
      %294 = vmatpush.msra.mxu0 %v184
      %295 = vmatpush.msra.mxu0 %v183
      %296 = vmatpush.msra.mxu0 %v182
      %297 = vmatpush.msra.mxu0 %v181
      %298 = vmatpush.msra.mxu0 %v180
      %299 = vmatpush.msra.mxu0 %v179
      %300 = vmatmul.f32.gmra.mxu0 %v189
      %v301 = vpop.f32.mrf.mxu0
      %v302 = vadd.f32 0.0, %v301
      %303 = vmatmul.f32.gmra.mxu0 %v192
      %v304 = vpop.f32.mrf.mxu0
      %v305 = vadd.f32 0.0, %v304
      %306 = vmatmul.f32.gmra.mxu0 %v195
      %v307 = vpop.f32.mrf.mxu0
      %v308 = vadd.f32 0.0, %v307
      %309 = vmatmul.f32.gmra.mxu0 %v198
      %v310 = vpop.f32.mrf.mxu0
      %v311 = vadd.f32 0.0, %v310
      %312 = vmatmul.f32.gmra.mxu0 %v201
      %v313 = vpop.f32.mrf.mxu0
      %v314 = vadd.f32 0.0, %v313
      %315 = vmatmul.f32.gmra.mxu0 %v204
      %v316 = vpop.f32.mrf.mxu0
      %v317 = vadd.f32 0.0, %v316
      %318 = vmatmul.f32.gmra.mxu0 %v207
      %v319 = vpop.f32.mrf.mxu0
      %v320 = vadd.f32 0.0, %v319
      %321 = vmatmul.f32.gmra.mxu0 %v210
      %v322 = vpop.f32.mrf.mxu0
      %v323 = vadd.f32 0.0, %v322
      %324 = vmatmul.f32.gmra.mxu0 %v213
      %v325 = vpop.f32.mrf.mxu0
      %v326 = vadd.f32 0.0, %v325
      %327 = vmatmul.f32.gmra.mxu0 %v216
      %v328 = vpop.f32.mrf.mxu0
      %v329 = vadd.f32 0.0, %v328
      %330 = vmatmul.f32.gmra.mxu0 %v219
      %v331 = vpop.f32.mrf.mxu0
      %v332 = vadd.f32 0.0, %v331
      %333 = vmatmul.f32.gmra.mxu0 %v222
      %v334 = vpop.f32.mrf.mxu0
      %v335 = vadd.f32 0.0, %v334
      %336 = vmatmul.f32.gmra.mxu0 %v225
      %v337 = vpop.f32.mrf.mxu0
      %v338 = vadd.f32 0.0, %v337
      %339 = vmatmul.f32.gmra.mxu0 %v228
      %v340 = vpop.f32.mrf.mxu0
      %v341 = vadd.f32 0.0, %v340
      %342 = vmatmul.f32.gmra.mxu0 %v231
      %v343 = vpop.f32.mrf.mxu0
      %v344 = vadd.f32 0.0, %v343
      %345 = vmatmul.f32.gmra.mxu0 %v234
      %v346 = vpop.f32.mrf.mxu0
      %v347 = vadd.f32 0.0, %v346
      %348 = vmatmul.f32.gmra.mxu0 %v237
      %v349 = vpop.f32.mrf.mxu0
      %v350 = vadd.f32 0.0, %v349
      %351 = vmatmul.f32.gmra.mxu0 %v240
      %v352 = vpop.f32.mrf.mxu0
      %v353 = vadd.f32 0.0, %v352
      %354 = vmatmul.f32.gmra.mxu0 %v243
      %v355 = vpop.f32.mrf.mxu0
      %v356 = vadd.f32 0.0, %v355
      %357 = vmatmul.f32.gmra.mxu0 %v246
      %v358 = vpop.f32.mrf.mxu0
      %v359 = vadd.f32 0.0, %v358
      %360 = vmatmul.f32.gmra.mxu0 %v249
      %v361 = vpop.f32.mrf.mxu0
      %v362 = vadd.f32 0.0, %v361
      %363 = vmatmul.f32.gmra.mxu0 %v252
      %v364 = vpop.f32.mrf.mxu0
      %v365 = vadd.f32 0.0, %v364
      %366 = vmatmul.f32.gmra.mxu0 %v255
      %v367 = vpop.f32.mrf.mxu0
      %v368 = vadd.f32 0.0, %v367
      %369 = vmatmul.f32.gmra.mxu0 %v258
      %v370 = vpop.f32.mrf.mxu0
      %v371 = vadd.f32 0.0, %v370
      %372 = vmatmul.f32.gmra.mxu0 %v261
      %v373 = vpop.f32.mrf.mxu0
      %v374 = vadd.f32 0.0, %v373
      %375 = vmatmul.f32.gmra.mxu0 %v264
      %v376 = vpop.f32.mrf.mxu0
      %v377 = vadd.f32 0.0, %v376
      %378 = vmatmul.f32.gmra.mxu0 %v267
      %v379 = vpop.f32.mrf.mxu0
      %v380 = vadd.f32 0.0, %v379
      %381 = vmatmul.f32.gmra.mxu0 %v270
      %v382 = vpop.f32.mrf.mxu0
      %v383 = vadd.f32 0.0, %v382
      %384 = vmatmul.f32.gmra.mxu0 %v273
      %v385 = vpop.f32.mrf.mxu0
      %v386 = vadd.f32 0.0, %v385
      %387 = vmatmul.f32.gmra.mxu0 %v276
      %v388 = vpop.f32.mrf.mxu0
      %v389 = vadd.f32 0.0, %v388
      %390 = vmatmul.f32.gmra.mxu0 %v279
      %v391 = vpop.f32.mrf.mxu0
      %v392 = vadd.f32 0.0, %v391
      %393 = vmatmul.f32.gmra.mxu0 %v282
      %v394 = vpop.f32.mrf.mxu0
      %v395 = vadd.f32 0.0, %v394
      %396 = vdwg.mxu0
      %vm397 = vcmask 261120
      %398 = vst.msk [vmem:[%s145] sm:$0xff] %vm397, %v302
      %399 = vst.msk [vmem:[%s145 + $0x8] sm:$0xff] %vm397, %v305
      %400 = vst.msk [vmem:[%s145 + $0x10] sm:$0xff] %vm397, %v308
      %401 = vst.msk [vmem:[%s145 + $0x18] sm:$0xff] %vm397, %v311
      %402 = vst.msk [vmem:[%s145 + $0x20] sm:$0xff] %vm397, %v314
      %403 = vst.msk [vmem:[%s145 + $0x28] sm:$0xff] %vm397, %v317
      %404 = vst.msk [vmem:[%s145 + $0x30] sm:$0xff] %vm397, %v320
      %405 = vst.msk [vmem:[%s145 + $0x38] sm:$0xff] %vm397, %v323
      %406 = vst.msk [vmem:[%s145 + $0x40] sm:$0xff] %vm397, %v326
      %407 = vst.msk [vmem:[%s145 + $0x48] sm:$0xff] %vm397, %v329
      %408 = vst.msk [vmem:[%s145 + $0x50] sm:$0xff] %vm397, %v332
      %409 = vst.msk [vmem:[%s145 + $0x58] sm:$0xff] %vm397, %v335
      %410 = vst.msk [vmem:[%s145 + $0x60] sm:$0xff] %vm397, %v338
      %411 = vst.msk [vmem:[%s145 + $0x68] sm:$0xff] %vm397, %v341
      %412 = vst.msk [vmem:[%s145 + $0x70] sm:$0xff] %vm397, %v344
      %413 = vst.msk [vmem:[%s145 + $0x78] sm:$0xff] %vm397, %v347
      %414 = vst.msk [vmem:[%s145 + $0x80] sm:$0xff] %vm397, %v350
      %415 = vst.msk [vmem:[%s145 + $0x88] sm:$0xff] %vm397, %v353
      %416 = vst.msk [vmem:[%s145 + $0x90] sm:$0xff] %vm397, %v356
      %417 = vst.msk [vmem:[%s145 + $0x98] sm:$0xff] %vm397, %v359
      %418 = vst.msk [vmem:[%s145 + $0xa0] sm:$0xff] %vm397, %v362
      %419 = vst.msk [vmem:[%s145 + $0xa8] sm:$0xff] %vm397, %v365
      %420 = vst.msk [vmem:[%s145 + $0xb0] sm:$0xff] %vm397, %v368
      %421 = vst.msk [vmem:[%s145 + $0xb8] sm:$0xff] %vm397, %v371
      %422 = vst.msk [vmem:[%s145 + $0xc0] sm:$0xff] %vm397, %v374
      %423 = vst.msk [vmem:[%s145 + $0xc8] sm:$0xff] %vm397, %v377
      %424 = vst.msk [vmem:[%s145 + $0xd0] sm:$0xff] %vm397, %v380
      %425 = vst.msk [vmem:[%s145 + $0xd8] sm:$0xff] %vm397, %v383
      %426 = vst.msk [vmem:[%s145 + $0xe0] sm:$0xff] %vm397, %v386
      %427 = vst.msk [vmem:[%s145 + $0xe8] sm:$0xff] %vm397, %v389
      %428 = vst.msk [vmem:[%s145 + $0xf0] sm:$0xff] %vm397, %v392
      %429 = vst.msk [vmem:[%s145 + $0xf8] sm:$0xff] %vm397, %v395
      %s430 = smul.u32 32, %s13
      %p431 = scmp.lt.s32.totalorder %s430, 63
      %s432 = scalar_select %p431, %s430, 63
      %s433 = smul.addr %s432, 8
      %s434 = scalar_lea.vmem %s2, %s433
      // Predicated region
      $region29: #{tpu_custom_call.1} parent=27 // pred_check
        %p435 = pneg %p78
      $region30: #{tpu_custom_call.1} parent=27 // pred_check_branch
        %437 = sbr.rel (%p435) target = $region32
      $region31: #{tpu_custom_call.1} parent=27 // pred_region
        %s438 = smul.u32 32, %s13
      $region32: #{tpu_custom_call.1} parent=27 // pred_fallthru
        _
    $region28: #{tpu_custom_call.1} parent=5 // pred_fallthru
      _
    %p439 = scmp.le.s32.totalorder 2, %s8
    // Predicated region
    $region33: #{tpu_custom_call.1} parent=5 // pred_check
      %p440 = pneg %p439
    $region34: #{tpu_custom_call.1} parent=5 // pred_check_branch
      %442 = sbr.rel (%p440) target = $region36
    $region35: #{tpu_custom_call.1} parent=5 // pred_region
      %s443 = ssub.s32 %s8, 2
      // Predicated region
      $region37: #{tpu_custom_call.1} parent=35 // pred_check
        %p444 = pneg %p84
      $region38: #{tpu_custom_call.1} parent=35 // pred_check_branch
        %446 = sbr.rel (%p444) target = $region40
      $region39: #{tpu_custom_call.1} parent=35 // pred_region
        %s447 = smul.u32 32, %s14
        %p448 = scmp.lt.s32.totalorder %s447, 63
        %s449 = scalar_select %p448, %s447, 63
        %s450 = smul.addr %s449, 8
        %s451 = scalar_lea.vmem %s2, %s450
      $region40: #{tpu_custom_call.1} parent=35 // pred_fallthru
        _
    $region36: #{tpu_custom_call.1} parent=5 // pred_fallthru
      _
  $region6: #{tpu_custom_call.1} parent=0 // loop_footer
    %s12 = sadd.s32 1, %s8
  $region7: #{tpu_custom_call.1} parent=0 // loop_footer_branch
    %7 = sbr.rel target = $region3
  $region8: #{tpu_custom_call.1} parent=0 // loop_exit
    _

</llo_original>
